<compile_context>
chip_gen: v7x
topology: tpu7x:2x2x1
jax: 0.10.0
libtpu: 0.0.40
codegen_flags: <defaults>
</compile_context>

<pallas_src>
import functools

import jax
import jax.numpy as jnp
from jax.experimental import pallas as pl
from jax.experimental.pallas import tpu as pltpu


def _jsd_kernel(p_ref, q_ref, o_ref, *, eps):
    # eps is a static Python float baked into the trace (no captured constant).
    p = jnp.maximum(p_ref[...].astype(jnp.float32), eps)
    q = jnp.maximum(q_ref[...].astype(jnp.float32), eps)
    m = 0.5 * (p + q)  # == exp(log m) in the PyTorch formulation
    log_m = jnp.log(m)
    # 0.5 * (m*(log m - log p) + m*(log m - log q))
    out = 0.5 * m * (2.0 * log_m - jnp.log(p) - jnp.log(q))
    o_ref[...] = out.astype(o_ref.dtype)


def _round_up(x, m):
    return (x + m - 1) // m * m


def jsd(p, q, eps=1e-12, *, block_elems=1 << 20):
    """Elementwise JSD terms, shape (prod(leading dims), last_dim)."""
    assert p.shape == q.shape, "p and q must have the same shape"
    d = p.shape[-1]
    n_rows_out = p.size // d
    total = p.size
    out_dtype = p.dtype

    # Lane-dense slab independent of D (the op is elementwise).  Pick the widest
    # lane tile that divides the total so no pad/slice copies are needed.
    tn = None
    for cand in (1024, 512, 256, 128):
        if total % cand == 0:
            tn = cand
            break
    needs_pad = tn is None
    if needs_pad:
        tn = 1024

    rows = pl.cdiv(total, tn)
    pf = p.reshape(-1)
    qf = q.reshape(-1)
    if needs_pad:
        # Rare fallback: pad with 1.0 (log-safe); padded tail sliced off below.
        pad = rows * tn - total
        pf = jnp.pad(pf, (0, pad), constant_values=1.0)
        qf = jnp.pad(qf, (0, pad), constant_values=1.0)
    p2 = pf.reshape(rows, tn)
    q2 = qf.reshape(rows, tn)

    # Row tile: target ~block_elems elements (~4 MiB f32) per block, multiple of 8.
    tm = min(max(8, block_elems // tn), _round_up(rows, 8))
    # v7x megacore occupancy: make sure there are >= 2 "parallel" grid steps.
    if rows > 8 and pl.cdiv(rows, tm) < 2:
        tm = _round_up(pl.cdiv(rows, 2), 8)

    grid = (pl.cdiv(rows, tm),)  # partial last block handled by Pallas
    spec = pl.BlockSpec((tm, tn), lambda i: (i, 0))

    cost = pl.CostEstimate(
        flops=8 * total,
        transcendentals=3 * total,
        bytes_accessed=2 * total * p.dtype.itemsize + total * out_dtype.itemsize,
    )

    out = pl.pallas_call(
        functools.partial(_jsd_kernel, eps=float(eps)),
        out_shape=jax.ShapeDtypeStruct((rows, tn), out_dtype),
        grid=grid,
        in_specs=[spec, spec],
        out_specs=spec,
        compiler_params=pltpu.CompilerParams(
            dimension_semantics=("parallel",),
            vmem_limit_bytes=32 << 20,  # 24 MiB of double-buffered blocks + headroom
        ),
        cost_estimate=cost,
    )(p2, q2)

    out = out.reshape(-1)
    if needs_pad:
        out = out[:total]
    return out.reshape(n_rows_out, d)


def _jsd_ref(p, q, eps=1e-12):
    d = p.shape[-1]
    p = jnp.maximum(p, eps).reshape(-1, d)
    q = jnp.maximum(q, eps).reshape(-1, d)
    m = jnp.log(0.5 * (p + q))
    kl = lambda inp, tgt: jnp.exp(tgt) * (tgt - inp)  # KLDivLoss(log_target=True, 'none')
    return 0.5 * (kl(jnp.log(p), m) + kl(jnp.log(q), m))


if __name__ == "__main__":
    key = jax.random.PRNGKey(0)
    kp, kq, kp2, kq2 = jax.random.split(key, 4)

    # Small shapes: batch=2, channels=4, seq=8, hidden(last dim)=128.
    shape = (2, 4, 8, 128)
    p = jax.nn.softmax(jax.random.normal(kp, shape, dtype=jnp.float32), axis=-1)
    q = jax.nn.softmax(jax.random.normal(kq, shape, dtype=jnp.float32), axis=-1)

    out = jax.block_until_ready(jsd(p, q))
    ref = _jsd_ref(p, q)
    assert out.shape == (2 * 4 * 8, 128), out.shape
    assert jnp.allclose(out, ref, atol=1e-6, rtol=1e-5), "mismatch vs reference"

    # Ragged-row case: exercises partial last block + 2-step grid, no padding copies.
    shape2 = (3, 5, 256)
    p2 = jax.nn.softmax(jax.random.normal(kp2, shape2, dtype=jnp.float32), axis=-1)
    q2 = jax.nn.softmax(jax.random.normal(kq2, shape2, dtype=jnp.float32), axis=-1)
    out2 = jax.block_until_ready(jsd(p2, q2))
    ref2 = _jsd_ref(p2, q2)
    assert out2.shape == (3 * 5, 256), out2.shape
    assert jnp.allclose(out2, ref2, atol=1e-6, rtol=1e-5), "mismatch vs reference (ragged)"

    print("KERNEL_OK")
</pallas_src>

<mosaic_0001>
module attributes {stable_mosaic.version = 11 : i64} {
  func.func @_jsd_kernel(%arg0: i32, %arg1: memref<8x1024xf32, #tpu.memory_space<vmem>>, %arg2: memref<8x1024xf32, #tpu.memory_space<vmem>>, %arg3: memref<8x1024xf32, #tpu.memory_space<vmem>>) attributes {dimension_semantics = [#tpu.dimension_semantics<parallel>], iteration_bounds = array<i64: 1>, scalar_prefetch = 0 : i64, scratch_operands = 0 : i64, tpu.core_type = #tpu.core_type<tc>, window_params = [{transform_indices = @transform_0, window_bounds = array<i64: 8, 1024>}, {transform_indices = @transform_1, window_bounds = array<i64: 8, 1024>}, {transform_indices = @transform_2, window_bounds = array<i64: 8, 1024>}]} {
    %c0 = arith.constant 0 : index
    %c0_0 = arith.constant 0 : index
    %0 = vector.load %arg1[%c0, %c0_0] : memref<8x1024xf32, #tpu.memory_space<vmem>>, vector<8x1024xf32>
    %cst = arith.constant 9.99999996E-13 : f32
    %1 = vector.broadcast %cst : f32 to vector<8x1024xf32>
    %2 = arith.maximumf %0, %1 : vector<8x1024xf32>
    %c0_1 = arith.constant 0 : index
    %c0_2 = arith.constant 0 : index
    %3 = vector.load %arg2[%c0_1, %c0_2] : memref<8x1024xf32, #tpu.memory_space<vmem>>, vector<8x1024xf32>
    %cst_3 = arith.constant 9.99999996E-13 : f32
    %4 = vector.broadcast %cst_3 : f32 to vector<8x1024xf32>
    %5 = arith.maximumf %3, %4 : vector<8x1024xf32>
    %6 = arith.addf %2, %5 : vector<8x1024xf32>
    %cst_4 = arith.constant 5.000000e-01 : f32
    %7 = vector.broadcast %cst_4 : f32 to vector<8x1024xf32>
    %8 = arith.mulf %7, %6 : vector<8x1024xf32>
    %9 = math.log %8 : vector<8x1024xf32>
    %cst_5 = arith.constant 5.000000e-01 : f32
    %10 = vector.broadcast %cst_5 : f32 to vector<8x1024xf32>
    %11 = arith.mulf %10, %8 : vector<8x1024xf32>
    %cst_6 = arith.constant 2.000000e+00 : f32
    %12 = vector.broadcast %cst_6 : f32 to vector<8x1024xf32>
    %13 = arith.mulf %12, %9 : vector<8x1024xf32>
    %14 = math.log %2 : vector<8x1024xf32>
    %15 = arith.subf %13, %14 : vector<8x1024xf32>
    %16 = math.log %5 : vector<8x1024xf32>
    %17 = arith.subf %15, %16 : vector<8x1024xf32>
    %18 = arith.mulf %11, %17 : vector<8x1024xf32>
    %c0_7 = arith.constant 0 : index
    %c0_8 = arith.constant 0 : index
    %19 = vector.load %arg3[%c0_7, %c0_8] : memref<8x1024xf32, #tpu.memory_space<vmem>>, vector<8x1024xf32>
    tpu.vector_store %arg3[%c0_7, %c0_8], %18 {strides = array<i32>} : memref<8x1024xf32, #tpu.memory_space<vmem>>, vector<8x1024xf32>,
    return
  }
  func.func @transform_0(%arg0: i32) -> (i32, i32) {
    %c0_i32 = arith.constant 0 : i32
    %c0_i32_0 = arith.constant 0 : i32
    return %arg0, %c0_i32 : i32, i32
  }
  func.func @transform_1(%arg0: i32) -> (i32, i32) {
    %c0_i32 = arith.constant 0 : i32
    %c0_i32_0 = arith.constant 0 : i32
    return %arg0, %c0_i32 : i32, i32
  }
  func.func @transform_2(%arg0: i32) -> (i32, i32) {
    %c0_i32 = arith.constant 0 : i32
    %c0_i32_0 = arith.constant 0 : i32
    return %arg0, %c0_i32 : i32, i32
  }
}

</mosaic_0001>

<llo_original>
// kernel: tpu_custom_call.1
$region0: #{tpu_custom_call.1}
  #allocation0 [shape = 'u32[]', space=smem, size = 0x4, offset = 0x4, fixed_abs, tag = 'smem constant byte address 0x4 - core index']
  #allocation1 [shape = 'u32[144,128]{1,0:T(1,128)}', space=vmem, size = 0x12000, scoped, tag = 'internal scratch']
  %s0 = inlined_call_operand.hbm [shape: f32[8,1024], index: 0, kind: input, shape index: {}]
  %s1 = inlined_call_operand.hbm [shape: f32[8,1024], index: 1, kind: input, shape index: {}]
  %s2 = inlined_call_operand.hbm [shape: f32[8,1024], index: 2, kind: output, shape index: {}]
  %s3 = sld [smem:[#allocation0]]
  $region26: #{tpu_custom_call.1} parent=0
    _
  %s5 = ssub.s32 1, %s3
  %s6 = scalar_select 0, %s5, %s3
  $region1: #{tpu_custom_call.1} parent=0
    #allocation2 [shape = 'u8[32768]{0}', space=vmem, size = 0x8000, scoped, tag = 'input window, operand 0, single buffered']
    #allocation3 [shape = 's32[1]{0}', space=sflag, size = 0x4, scoped, tag = 'scoped memory for tpu_custom_call.1']
    #allocation4 [shape = 's32[1]{0}', space=sflag, size = 0x4, scoped, tag = 'scoped memory for tpu_custom_call.1']
    #allocation5 [shape = 'u8[32768]{0}', space=vmem, size = 0x8000, scoped, tag = 'input window, operand 1, single buffered']
    #allocation6 [shape = 's32[1]{0}', space=sflag, size = 0x4, scoped, tag = 'scoped memory for tpu_custom_call.1']
    #allocation7 [shape = 'u8[32768]{0}', space=vmem, size = 0x8000, scoped, tag = 'output window, operand 0, single buffered']
    %7 = vsyncpa [#allocation3], 0
    %8 = vsyncpa [#allocation6], 0
    %9 = vsyncpa [#allocation4], 0
    // Predicated region
    $region2: #{tpu_custom_call.1} parent=1 // pred_check
      _
    $region3: #{tpu_custom_call.1} parent=1 // pred_check_branch
      %11 = sbr.rel (0) target = $region5
    $region4: #{tpu_custom_call.1} parent=1 // pred_region
      %s13 = ssub.s32 1024, 1024
      %14 = vsyncadd [#allocation3], %s13
      %s16 = sshll.u32 [#allocation2], 4
      %s17 = int_to_ptr.vmem [resolvable:$true] %s16
      %19 = dma.hbm_to_vmem [thread:$0]  %s0, 1024, %s17, [#allocation3]
    $region5: #{tpu_custom_call.1} parent=1 // pred_fallthru
      _
    // Predicated region
    $region6: #{tpu_custom_call.1} parent=1 // pred_check
      _
    $region7: #{tpu_custom_call.1} parent=1 // pred_check_branch
      %21 = sbr.rel (0) target = $region9
    $region8: #{tpu_custom_call.1} parent=1 // pred_region
      %s23 = ssub.s32 1024, 1024
      %24 = vsyncadd [#allocation6], %s23
      %s26 = sshll.u32 [#allocation5], 4
      %s27 = int_to_ptr.vmem [resolvable:$true] %s26
      %29 = dma.hbm_to_vmem [thread:$0]  %s1, 1024, %s27, [#allocation6]
    $region9: #{tpu_custom_call.1} parent=1 // pred_fallthru
      _
    // Predicated region
    $region10: #{tpu_custom_call.1} parent=1 // pred_check
      _
    $region11: #{tpu_custom_call.1} parent=1 // pred_check_branch
      %31 = sbr.rel (0) target = $region13
    $region12: #{tpu_custom_call.1} parent=1 // pred_region
      %32 = dma.done [#allocation3], 1024
    $region13: #{tpu_custom_call.1} parent=1 // pred_fallthru
      _
    // Predicated region
    $region14: #{tpu_custom_call.1} parent=1 // pred_check
      _
    $region15: #{tpu_custom_call.1} parent=1 // pred_check_branch
      %34 = sbr.rel (0) target = $region17
    $region16: #{tpu_custom_call.1} parent=1 // pred_region
      %35 = dma.done [#allocation6], 1024
    $region17: #{tpu_custom_call.1} parent=1 // pred_fallthru
      _
    %v36 = vld [vmem:[#allocation2] sm:$0xff]
    %v37 = vld [vmem:[#allocation2 + $0x8] sm:$0xff]
    %v38 = vld [vmem:[#allocation2 + $0x10] sm:$0xff]
    %v39 = vld [vmem:[#allocation2 + $0x18] sm:$0xff]
    %v40 = vld [vmem:[#allocation2 + $0x20] sm:$0xff]
    %v41 = vld [vmem:[#allocation2 + $0x28] sm:$0xff]
    %v42 = vld [vmem:[#allocation2 + $0x30] sm:$0xff]
    %v43 = vld [vmem:[#allocation2 + $0x38] sm:$0xff]
    %v44 = vmax.f32 %v36, 1e-12
    %v45 = vmax.f32 %v37, 1e-12
    %v46 = vmax.f32 %v38, 1e-12
    %v47 = vmax.f32 %v39, 1e-12
    %v48 = vmax.f32 %v40, 1e-12
    %v49 = vmax.f32 %v41, 1e-12
    %v50 = vmax.f32 %v42, 1e-12
    %v51 = vmax.f32 %v43, 1e-12
    %v52 = vld [vmem:[#allocation5] sm:$0xff]
    %v53 = vld [vmem:[#allocation5 + $0x8] sm:$0xff]
    %v54 = vld [vmem:[#allocation5 + $0x10] sm:$0xff]
    %v55 = vld [vmem:[#allocation5 + $0x18] sm:$0xff]
    %v56 = vld [vmem:[#allocation5 + $0x20] sm:$0xff]
    %v57 = vld [vmem:[#allocation5 + $0x28] sm:$0xff]
    %v58 = vld [vmem:[#allocation5 + $0x30] sm:$0xff]
    %v59 = vld [vmem:[#allocation5 + $0x38] sm:$0xff]
    %v60 = vmax.f32 %v52, 1e-12
    %v61 = vmax.f32 %v53, 1e-12
    %v62 = vmax.f32 %v54, 1e-12
    %v63 = vmax.f32 %v55, 1e-12
    %v64 = vmax.f32 %v56, 1e-12
    %v65 = vmax.f32 %v57, 1e-12
    %v66 = vmax.f32 %v58, 1e-12
    %v67 = vmax.f32 %v59, 1e-12
    %v68 = vadd.f32 %v44, %v60
    %v69 = vadd.f32 %v45, %v61
    %v70 = vadd.f32 %v46, %v62
    %v71 = vadd.f32 %v47, %v63
    %v72 = vadd.f32 %v48, %v64
    %v73 = vadd.f32 %v49, %v65
    %v74 = vadd.f32 %v50, %v66
    %v75 = vadd.f32 %v51, %v67
    %v76 = vmul.f32 %v68, 0.5
    %v77 = vmul.f32 %v69, 0.5
    %v78 = vmul.f32 %v70, 0.5
    %v79 = vmul.f32 %v71, 0.5
    %v80 = vmul.f32 %v72, 0.5
    %v81 = vmul.f32 %v73, 0.5
    %v82 = vmul.f32 %v74, 0.5
    %v83 = vmul.f32 %v75, 0.5
    %v84 = vlog2.pop %v76
    %v85 = vmul.f32 %v84, 0.6931472
    %v86 = vlog2.pop %v77
    %v87 = vmul.f32 %v86, 0.6931472
    %v88 = vlog2.pop %v78
    %v89 = vmul.f32 %v88, 0.6931472
    %v90 = vlog2.pop %v79
    %v91 = vmul.f32 %v90, 0.6931472
    %v92 = vlog2.pop %v80
    %v93 = vmul.f32 %v92, 0.6931472
    %v94 = vlog2.pop %v81
    %v95 = vmul.f32 %v94, 0.6931472
    %v96 = vlog2.pop %v82
    %v97 = vmul.f32 %v96, 0.6931472
    %v98 = vlog2.pop %v83
    %v99 = vmul.f32 %v98, 0.6931472
    %v100 = vmul.f32 %v76, 0.5
    %v101 = vmul.f32 %v77, 0.5
    %v102 = vmul.f32 %v78, 0.5
    %v103 = vmul.f32 %v79, 0.5
    %v104 = vmul.f32 %v80, 0.5
    %v105 = vmul.f32 %v81, 0.5
    %v106 = vmul.f32 %v82, 0.5
    %v107 = vmul.f32 %v83, 0.5
    %v108 = vmul.f32 %v85, 2.0
    %v109 = vmul.f32 %v87, 2.0
    %v110 = vmul.f32 %v89, 2.0
    %v111 = vmul.f32 %v91, 2.0
    %v112 = vmul.f32 %v93, 2.0
    %v113 = vmul.f32 %v95, 2.0
    %v114 = vmul.f32 %v97, 2.0
    %v115 = vmul.f32 %v99, 2.0
    %v116 = vlog2.pop %v44
    %v117 = vmul.f32 %v116, 0.6931472
    %v118 = vlog2.pop %v45
    %v119 = vmul.f32 %v118, 0.6931472
    %v120 = vlog2.pop %v46
    %v121 = vmul.f32 %v120, 0.6931472
    %v122 = vlog2.pop %v47
    %v123 = vmul.f32 %v122, 0.6931472
    %v124 = vlog2.pop %v48
    %v125 = vmul.f32 %v124, 0.6931472
    %v126 = vlog2.pop %v49
    %v127 = vmul.f32 %v126, 0.6931472
    %v128 = vlog2.pop %v50
    %v129 = vmul.f32 %v128, 0.6931472
    %v130 = vlog2.pop %v51
    %v131 = vmul.f32 %v130, 0.6931472
    %v132 = vsub.f32 %v108, %v117
    %v133 = vsub.f32 %v109, %v119
    %v134 = vsub.f32 %v110, %v121
    %v135 = vsub.f32 %v111, %v123
    %v136 = vsub.f32 %v112, %v125
    %v137 = vsub.f32 %v113, %v127
    %v138 = vsub.f32 %v114, %v129
    %v139 = vsub.f32 %v115, %v131
    %v140 = vlog2.pop %v60
    %v141 = vmul.f32 %v140, 0.6931472
    %v142 = vlog2.pop %v61
    %v143 = vmul.f32 %v142, 0.6931472
    %v144 = vlog2.pop %v62
    %v145 = vmul.f32 %v144, 0.6931472
    %v146 = vlog2.pop %v63
    %v147 = vmul.f32 %v146, 0.6931472
    %v148 = vlog2.pop %v64
    %v149 = vmul.f32 %v148, 0.6931472
    %v150 = vlog2.pop %v65
    %v151 = vmul.f32 %v150, 0.6931472
    %v152 = vlog2.pop %v66
    %v153 = vmul.f32 %v152, 0.6931472
    %v154 = vlog2.pop %v67
    %v155 = vmul.f32 %v154, 0.6931472
    %v156 = vsub.f32 %v132, %v141
    %v157 = vsub.f32 %v133, %v143
    %v158 = vsub.f32 %v134, %v145
    %v159 = vsub.f32 %v135, %v147
    %v160 = vsub.f32 %v136, %v149
    %v161 = vsub.f32 %v137, %v151
    %v162 = vsub.f32 %v138, %v153
    %v163 = vsub.f32 %v139, %v155
    %v164 = vmul.f32 %v100, %v156
    %v165 = vmul.f32 %v101, %v157
    %v166 = vmul.f32 %v102, %v158
    %v167 = vmul.f32 %v103, %v159
    %v168 = vmul.f32 %v104, %v160
    %v169 = vmul.f32 %v105, %v161
    %v170 = vmul.f32 %v106, %v162
    %v171 = vmul.f32 %v107, %v163
    %172 = vst [vmem:[#allocation7] sm:$0xff] %v164
    %173 = vst [vmem:[#allocation7 + $0x8] sm:$0xff] %v165
    %174 = vst [vmem:[#allocation7 + $0x10] sm:$0xff] %v166
    %175 = vst [vmem:[#allocation7 + $0x18] sm:$0xff] %v167
    %176 = vst [vmem:[#allocation7 + $0x20] sm:$0xff] %v168
    %177 = vst [vmem:[#allocation7 + $0x28] sm:$0xff] %v169
    %178 = vst [vmem:[#allocation7 + $0x30] sm:$0xff] %v170
    %179 = vst [vmem:[#allocation7 + $0x38] sm:$0xff] %v171
    // Predicated region
    $region18: #{tpu_custom_call.1} parent=1 // pred_check
      _
    $region19: #{tpu_custom_call.1} parent=1 // pred_check_branch
      %181 = sbr.rel (0) target = $region21
    $region20: #{tpu_custom_call.1} parent=1 // pred_region
      %s183 = ssub.s32 1024, 1024
      %184 = vsyncadd [#allocation4], %s183
      %s186 = sshll.u32 [#allocation7], 4
      %s187 = int_to_ptr.vmem [resolvable:$true] %s186
      %189 = dma.vmem_to_hbm [thread:$0]  %s187, 1024, %s2, [#allocation4]
    $region21: #{tpu_custom_call.1} parent=1 // pred_fallthru
      _
    // Predicated region
    $region22: #{tpu_custom_call.1} parent=1 // pred_check
      _
    $region23: #{tpu_custom_call.1} parent=1 // pred_check_branch
      %191 = sbr.rel (0) target = $region25
    $region24: #{tpu_custom_call.1} parent=1 // pred_region
      %192 = dma.done [#allocation4], 1024
    $region25: #{tpu_custom_call.1} parent=1 // pred_fallthru
      _
    %193 = vsyncpa [#allocation3], 1
    %194 = vsyncpa [#allocation6], 1
    %195 = vsyncpa [#allocation4], 1

</llo_original>
